<compile_context>
chip_gen: v5e
topology: v5e:2x2
jax: 0.10.0
libtpu: 0.0.40
codegen_flags: <defaults>
</compile_context>

<pallas_src>
import functools

import jax
import jax.numpy as jnp
from jax.experimental import pallas as pl
from jax.experimental.pallas import tpu as pltpu


def _round_up(x, m):
    return ((x + m - 1) // m) * m


# ---------------------------------------------------------------------------
# Kernel 1: per-relation feature transform   HW[r] = H @ W[r]
# ---------------------------------------------------------------------------
def _hw_kernel(h_ref, w_ref, o_ref):
    o_ref[0] = jnp.dot(
        h_ref[...], w_ref[0], preferred_element_type=jnp.float32
    ).astype(o_ref.dtype)


# ---------------------------------------------------------------------------
# Kernel 2: message aggregation   out[dst] = act( sum_r A_r @ HW[r] )
# grid = (dst_tiles [parallel], num_rels [reduction], src_tiles [reduction])
# Output block index is constant over (r, k) -> it stays VMEM-resident and is
# used directly as the f32 accumulator (no scratch).
# ---------------------------------------------------------------------------
def _spmm_kernel(hw_ref, a_ref, o_ref, *, use_activation):
    r = pl.program_id(1)
    k = pl.program_id(2)

    @pl.when(jnp.logical_and(r == 0, k == 0))
    def _():
        o_ref[...] = jnp.zeros_like(o_ref)

    # (tm, tk) bf16 @ (tk, out_p) bf16 -> f32  (MXU, f32 accumulation)
    o_ref[...] += jnp.dot(a_ref[0], hw_ref[0], preferred_element_type=jnp.float32)

    @pl.when(
        jnp.logical_and(
            r == pl.num_programs(1) - 1, k == pl.num_programs(2) - 1
        )
    )
    def _():
        if use_activation:
            o_ref[...] = jnp.maximum(o_ref[...], 0.0)  # ReLU


# ---------------------------------------------------------------------------
# Wrapper
# ---------------------------------------------------------------------------
def rgcn_layer_pallas(
    h,
    weight_rel,
    adj,
    *,
    use_activation=True,
    tm=256,                      # dst tile (<=512 keeps v7x VMEM happy)
    tk=256,                      # src tile (K of the SpMM)
    compute_dtype=jnp.bfloat16,  # streaming dtype for A / HW (f32 accumulate)
    vmem_limit_bytes=48 * 1024 * 1024,
):
    """R-GCN message passing:  out = act( sum_r A_r @ (H @ W_r) ).

    h          : (N, in_feat)            node features
    weight_rel : (R, in_feat, out_feat)  per-relation weight matrices
    adj        : (R, N, N)  adj[r, dst, src] = edge norm (0 if no edge)
    """
    num_rels, in_feat, out_feat = weight_rel.shape
    n = h.shape[0]

    # ---- TPU-friendly padded shapes / tile sizes -------------------------
    out_p = _round_up(out_feat, 128)          # lane-dense output / HW cols
    tm = min(tm, _round_up(n, 8))             # sublane-aligned dst tile
    tk = min(tk, _round_up(n, 128))           # lane-aligned src tile
    nd = _round_up(n, tm)                     # padded dst extent
    ns = _round_up(n, tk)                     # padded src extent
    itemsize = jnp.dtype(compute_dtype).itemsize

    # ---- pad & cast inputs (zero padding is exact: contributes nothing) --
    h_p = jnp.pad(h, ((0, ns - n), (0, 0))).astype(compute_dtype)
    w_p = jnp.pad(
        weight_rel, ((0, 0), (0, 0), (0, out_p - out_feat))
    ).astype(compute_dtype)
    a_p = jnp.pad(adj, ((0, 0), (0, nd - n), (0, ns - n))).astype(compute_dtype)

    # ---- kernel 1: HW = H @ W_r, once per relation ------------------------
    hw = pl.pallas_call(
        _hw_kernel,
        out_shape=jax.ShapeDtypeStruct((num_rels, ns, out_p), compute_dtype),
        grid_spec=pltpu.PrefetchScalarGridSpec(
            num_scalar_prefetch=0,
            grid=(num_rels, ns // tk),
            in_specs=[
                pl.BlockSpec((tk, in_feat), lambda r, j: (j, 0)),
                pl.BlockSpec((1, in_feat, out_p), lambda r, j: (r, 0, 0)),
            ],
            out_specs=pl.BlockSpec((1, tk, out_p), lambda r, j: (r, j, 0)),
        ),
        compiler_params=pltpu.CompilerParams(
            dimension_semantics=("parallel", "parallel"),
            vmem_limit_bytes=vmem_limit_bytes,
        ),
        cost_estimate=pl.CostEstimate(
            flops=2 * num_rels * ns * in_feat * out_p,
            transcendentals=0,
            bytes_accessed=(
                ns * in_feat * itemsize
                + num_rels * in_feat * out_p * itemsize
                + num_rels * ns * out_p * itemsize
            ),
        ),
    )(h_p, w_p)

    # ---- kernel 2: tiled out = act( sum_r A_r @ HW_r ) --------------------
    # NOTE(v5e): if still DMA-latency bound, pipeline_mode=pl.Buffered(3) on
    # the A BlockSpec is the next thing to sweep.
    out_padded = pl.pallas_call(
        functools.partial(_spmm_kernel, use_activation=use_activation),
        out_shape=jax.ShapeDtypeStruct((nd, out_p), jnp.float32),
        grid_spec=pltpu.PrefetchScalarGridSpec(
            num_scalar_prefetch=0,
            grid=(nd // tm, num_rels, ns // tk),
            in_specs=[
                pl.BlockSpec((1, tk, out_p), lambda i, r, k: (r, k, 0)),
                pl.BlockSpec((1, tm, tk), lambda i, r, k: (r, i, k)),
            ],
            out_specs=pl.BlockSpec((tm, out_p), lambda i, r, k: (i, 0)),
        ),
        compiler_params=pltpu.CompilerParams(
            dimension_semantics=("parallel", "arbitrary", "arbitrary"),
            vmem_limit_bytes=vmem_limit_bytes,
        ),
        cost_estimate=pl.CostEstimate(
            flops=2 * num_rels * nd * ns * out_p,
            transcendentals=0,
            bytes_accessed=(
                num_rels * nd * ns * itemsize
                + num_rels * ns * out_p * itemsize
                + nd * out_p * 4
            ),
        ),
    )(hw, a_p)

    out = out_padded[:n, :out_feat]
    return out.astype(h.dtype)


def xavier_normal(key, shape, gain):
    # torch.nn.init.xavier_normal_ fan computation for >=2-D tensors
    receptive = 1
    for d in shape[2:]:
        receptive *= d
    fan_in = shape[1] * receptive
    fan_out = shape[0] * receptive
    std = gain * (2.0 / (fan_in + fan_out)) ** 0.5
    return std * jax.random.normal(key, shape, dtype=jnp.float32)


if __name__ == "__main__":
    hp = jax.lax.Precision.HIGHEST

    # ======================================================================
    # Case 1: lane-dense shapes (out_feat multiple of 128), exercises tiling
    # ======================================================================
    N, E = 256, 1024
    in_feat, out_feat = 128, 128
    num_rels, num_bases = 4, 2          # num_bases < num_rels -> w_comp path
    freeze = (0, 0)
    feat_drop = 0.0                     # nn.Dropout(0) == identity
    # TODO(synk): feat_drop > 0 (training-mode dropout) not exercised here.

    key = jax.random.PRNGKey(0)
    k_w, k_c, k_h, k_src, k_dst, k_rel, k_norm, k2 = jax.random.split(key, 8)

    weight = xavier_normal(k_w, (num_bases, in_feat + freeze[0], out_feat), 1.414)
    w_comp = xavier_normal(k_c, (num_rels, num_bases), 1.414)

    h = jax.random.normal(k_h, (N, in_feat), dtype=jnp.float32)
    src = jax.random.randint(k_src, (E,), 0, N)
    dst = jax.random.randint(k_dst, (E,), 0, N)
    rel = jax.random.randint(k_rel, (E,), 0, num_rels)
    norm = jax.random.uniform(k_norm, (E,), dtype=jnp.float32, minval=0.1, maxval=1.0)

    # basis decomposition (exact torch view -> matmul -> view semantics)
    w_view = weight.reshape(in_feat + freeze[0], num_bases, out_feat)
    weight_rel = jnp.matmul(w_comp, w_view)                       # (I, R, O)
    weight_rel = weight_rel.reshape(num_rels, in_feat + freeze[0], out_feat)

    # dense per-relation normalized adjacency, stored bf16 in HBM
    adj32 = jnp.zeros((num_rels, N, N), jnp.float32).at[rel, dst, src].add(norm)
    adj = adj32.astype(jnp.bfloat16)

    out = rgcn_layer_pallas(h, weight_rel, adj, use_activation=True, tm=128, tk=128)
    out = jax.block_until_ready(out)
    assert out.shape == (N, out_feat)

    # reference A: mirrors the kernel's bf16 quantization (tight check)
    hw_q = jnp.einsum(
        "ni,rio->rno",
        h.astype(jnp.bfloat16).astype(jnp.float32),
        weight_rel.astype(jnp.bfloat16).astype(jnp.float32),
        precision=hp,
    ).astype(jnp.bfloat16)
    ref_q = jnp.einsum(
        "rds,rso->do", adj.astype(jnp.float32), hw_q.astype(jnp.float32),
        precision=hp,
    )
    ref_q = jnp.maximum(ref_q, 0.0)
    assert jnp.allclose(out, ref_q, atol=1e-2, rtol=1e-2), "mismatch vs quantized ref"

    # reference B: exact f32 per-edge gather/bmm/scatter-add (torch semantics)
    msg = jnp.einsum("ei,eio->eo", h[src], weight_rel[rel], precision=hp)
    msg = msg * norm[:, None]
    ref = jnp.zeros((N, out_feat), jnp.float32).at[dst].add(msg)
    ref = jnp.maximum(ref, 0.0)
    assert jnp.allclose(out, ref, atol=3e-2, rtol=3e-2), "mismatch vs exact ref"

    # ======================================================================
    # Case 2: tiny, non-aligned shapes -> exercises padding + tile capping,
    #         and the num_bases == num_rels (no w_comp) branch.
    # ======================================================================
    N2, E2, in2, out2, R2 = 16, 40, 32, 48, 3
    k2w, k2h, k2s, k2d, k2r, k2n = jax.random.split(k2, 6)
    weight2 = xavier_normal(k2w, (R2, in2, out2), 1.414)          # used directly
    h2 = jax.random.normal(k2h, (N2, in2), dtype=jnp.float32)
    src2 = jax.random.randint(k2s, (E2,), 0, N2)
    dst2 = jax.random.randint(k2d, (E2,), 0, N2)
    rel2 = jax.random.randint(k2r, (E2,), 0, R2)
    norm2 = jax.random.uniform(k2n, (E2,), dtype=jnp.float32, minval=0.1, maxval=1.0)
    adj2 = jnp.zeros((R2, N2, N2), jnp.float32).at[rel2, dst2, src2].add(norm2)
    adj2 = adj2.astype(jnp.bfloat16)

    out2_arr = rgcn_layer_pallas(h2, weight2, adj2, use_activation=True)
    out2_arr = jax.block_until_ready(out2_arr)
    assert out2_arr.shape == (N2, out2)

    msg2 = jnp.einsum("ei,eio->eo", h2[src2], weight2[rel2], precision=hp)
    msg2 = msg2 * norm2[:, None]
    ref2 = jnp.zeros((N2, out2), jnp.float32).at[dst2].add(msg2)
    ref2 = jnp.maximum(ref2, 0.0)
    assert jnp.allclose(out2_arr, ref2, atol=3e-2, rtol=3e-2), "mismatch (tiny case)"

    print("KERNEL_OK")
</pallas_src>

<mosaic_0001>
module attributes {stable_mosaic.version = 11 : i64} {
  func.func @_hw_kernel(%arg0: i32, %arg1: i32, %arg2: memref<128x128xbf16, #tpu.memory_space<vmem>>, %arg3: memref<1x128x128xbf16, #tpu.memory_space<vmem>>, %arg4: memref<1x128x128xbf16, #tpu.memory_space<vmem>>) attributes {dimension_semantics = [#tpu.dimension_semantics<parallel>, #tpu.dimension_semantics<parallel>], iteration_bounds = array<i64: 4, 2>, scalar_prefetch = 0 : i64, scratch_operands = 0 : i64, tpu.core_type = #tpu.core_type<tc>, window_params = [{transform_indices = @transform_0, window_bounds = array<i64: 128, 128>}, {transform_indices = @transform_1, window_bounds = array<i64: 1, 128, 128>}, {transform_indices = @transform_2, window_bounds = array<i64: 1, 128, 128>}]} {
    %c0 = arith.constant 0 : index
    %c0_0 = arith.constant 0 : index
    %0 = vector.load %arg2[%c0, %c0_0] : memref<128x128xbf16, #tpu.memory_space<vmem>>, vector<128x128xbf16>
    %c0_1 = arith.constant 0 : index
    %c0_2 = arith.constant 0 : index
    %c0_3 = arith.constant 0 : index
    %1 = vector.load %arg3[%c0_1, %c0_2, %c0_3] : memref<1x128x128xbf16, #tpu.memory_space<vmem>>, vector<1x128x128xbf16>
    %2 = vector.shape_cast %1 : vector<1x128x128xbf16> to vector<128x128xbf16>
    %cst = arith.constant dense<0.000000e+00> : vector<128x128xf32>
    %3 = tpu.matmul %0, %2, %cst {dimension_numbers = #tpu.dot_dimension_numbers<[1], [0], [0], [1], [0, 0, 1, 1], [], []>} : vector<128x128xbf16>, vector<128x128xbf16>, vector<128x128xf32> -> vector<128x128xf32>
    %4 = arith.truncf %3 : vector<128x128xf32> to vector<128x128xbf16>
    %c0_4 = arith.constant 0 : index
    %c0_5 = arith.constant 0 : index
    %c0_6 = arith.constant 0 : index
    %5 = vector.load %arg4[%c0_4, %c0_5, %c0_6] : memref<1x128x128xbf16, #tpu.memory_space<vmem>>, vector<1x128x128xbf16>
    %6 = vector.shape_cast %5 : vector<1x128x128xbf16> to vector<128x128xbf16>
    %7 = vector.shape_cast %4 : vector<128x128xbf16> to vector<1x128x128xbf16>
    tpu.vector_store %arg4[%c0_4, %c0_5, %c0_6], %7 {strides = array<i32>} : memref<1x128x128xbf16, #tpu.memory_space<vmem>>, vector<1x128x128xbf16>,
    return
  }
  func.func @transform_0(%arg0: i32, %arg1: i32) -> (i32, i32) {
    %c0_i32 = arith.constant 0 : i32
    %c0_i32_0 = arith.constant 0 : i32
    return %arg1, %c0_i32 : i32, i32
  }
  func.func @transform_1(%arg0: i32, %arg1: i32) -> (i32, i32, i32) {
    %c0_i32 = arith.constant 0 : i32
    %c0_i32_0 = arith.constant 0 : i32
    %c0_i32_1 = arith.constant 0 : i32
    return %arg0, %c0_i32, %c0_i32_0 : i32, i32, i32
  }
  func.func @transform_2(%arg0: i32, %arg1: i32) -> (i32, i32, i32) {
    %c0_i32 = arith.constant 0 : i32
    %c0_i32_0 = arith.constant 0 : i32
    return %arg0, %arg1, %c0_i32 : i32, i32, i32
  }
}

</mosaic_0001>

<llo_original>
// kernel: tpu_custom_call.1
$region0: #{tpu_custom_call.1}
  #allocation0 [shape = 'u32[]', space=smem, size = 0x4, offset = 0x4, fixed_abs, tag = 'smem constant byte address 0x4 - core index']
  #allocation1 [shape = 'u32[72,128]{1,0:T(1,128)}', space=vmem, size = 0x9000, scoped, tag = 'internal scratch']
  %s0 = inlined_call_operand.hbm [shape: bf16[256,128], index: 0, kind: input, shape index: {}]
  %s1 = inlined_call_operand.hbm [shape: bf16[4,128,128], index: 1, kind: input, shape index: {}]
  %s2 = inlined_call_operand.hbm [shape: bf16[4,256,128], index: 2, kind: output, shape index: {}]
  %s3 = sld [smem:[#allocation0]]
  $region49: #{tpu_custom_call.1} parent=0
    _
  %s5 = ssub.s32 1, %s3
  %s6 = scalar_select 0, %s5, %s3
  $region1: #{tpu_custom_call.1} parent=0
    #allocation2 [shape = 'u8[65536]{0}', space=vmem, size = 0x10000, scoped, tag = 'input window, operand 0']
    #allocation3 [shape = 's32[2]{0}', space=sflag, size = 0x8, scoped, tag = 'scoped memory for tpu_custom_call.1']
    #allocation4 [shape = 's32[2]{0}', space=sflag, size = 0x8, scoped, tag = 'scoped memory for tpu_custom_call.1']
    #allocation5 [shape = 'u8[65536]{0}', space=vmem, size = 0x10000, scoped, tag = 'input window, operand 1']
    #allocation6 [shape = 's32[2]{0}', space=sflag, size = 0x8, scoped, tag = 'scoped memory for tpu_custom_call.1']
    #allocation7 [shape = 'u8[65536]{0}', space=vmem, size = 0x10000, scoped, tag = 'output window, operand 0']
    %7 = vsyncpa [#allocation3], 0
    %s8 = scalar_lea.sflag [#allocation3], 1
    %9 = vsyncpa %s8, 0
    %10 = vsyncpa [#allocation6], 0
    %s11 = scalar_lea.sflag [#allocation6], 1
    %12 = vsyncpa %s11, 0
    %13 = vsyncpa [#allocation4], 0
    %s14 = scalar_lea.sflag [#allocation4], 1
    %15 = vsyncpa %s14, 0
    loop: start=0, step=1, limit=10
    $region2: #{tpu_custom_call.1} parent=1 // loop_pre_header
      _
    $region3: #{tpu_custom_call.1} parent=1 // loop_header
      %s17 = sphi 0, %s21
      %p18 = scmp.ge.s32.totalorder %s17, 10
      %s24 = sphi 0, %s36
      %s25 = sphi 0, %s32
      %s26 = sphi 0, %s24
      %s27 = sphi 0, %s25
      %s28 = sphi 0, %s26
      %s29 = sphi 0, %s27
      %s39 = sphi 0, %s41
      %s42 = sphi 0, %s39
      %s43 = sphi 0, %s42
      %s59 = sphi 0, %s43
      %s65 = sphi 0, %s67
      %s68 = sphi 0, %s65
      %s69 = sphi 0, %s68
      %s85 = sphi 0, %s69
      %s93 = sphi 0, %s95
      %s96 = sphi 0, %s93
      %s97 = sphi 0, %s96
      %s113 = sphi 0, %s97
    $region4: #{tpu_custom_call.1} parent=1 // loop_header_branch
      %20 = sbr.rel (%p18) target = $region8
    $region5: #{tpu_custom_call.1} parent=1 // loop_body
      %s22 = ssub.s32 %s17, 1
      %s23 = ssub.s32 %s17, 2
      %s30 = sadd.s32 1, %s25
      %p31 = scmp.ge.s32.totalorder %s30, 2
      %s32 = scalar_select %p31, 0, %s30
      %s33 = sadd.s32 1, %s24
      %s34 = scalar_select %p31, %s33, %s24
      %p35 = scmp.ge.s32.totalorder %s34, 4
      %s36 = scalar_select %p35, 0, %s34
      %s37 = ssub.s32 %s25, %s32
      %p38 = scmp.eq.s32.totalorder %s37, 0
      %s40 = sadd.s32 %s39, 1
      %s41 = scalar_select %p38, %s39, %s40
      %p44 = pneg %p38
      %p45 = scmp.eq.s32.totalorder %s17, 7
      %p46 = por %p44, %p45
      %p47 = scmp.ne.s32.totalorder %s39, %s42
      %p48 = scmp.eq.s32.totalorder %s17, 0
      %p49 = por %p47, %p48
      %p50 = scmp.ne.s32.totalorder %s39, %s42
      %p51 = scmp.eq.s32.totalorder %s22, 7
      %p52 = por %p50, %p51
      %p53 = scmp.ne.s32.totalorder %s42, %s43
      %p54 = scmp.eq.s32.totalorder %s22, 0
      %p55 = por %p53, %p54
      %p56 = scmp.ne.s32.totalorder %s42, %s43
      %p57 = scmp.eq.s32.totalorder %s23, 7
      %p58 = por %p56, %p57
      %p60 = scmp.ne.s32.totalorder %s43, %s59
      %p61 = scmp.eq.s32.totalorder %s23, 0
      %p62 = por %p60, %p61
      %s63 = ssub.s32 %s24, %s36
      %p64 = scmp.eq.s32.totalorder %s63, 0
      %s66 = sadd.s32 %s65, 1
      %s67 = scalar_select %p64, %s65, %s66
      %p70 = pneg %p64
      %p71 = scmp.eq.s32.totalorder %s17, 7
      %p72 = por %p70, %p71
      %p73 = scmp.ne.s32.totalorder %s65, %s68
      %p74 = scmp.eq.s32.totalorder %s17, 0
      %p75 = por %p73, %p74
      %p76 = scmp.ne.s32.totalorder %s65, %s68
      %p77 = scmp.eq.s32.totalorder %s22, 7
      %p78 = por %p76, %p77
      %p79 = scmp.ne.s32.totalorder %s68, %s69
      %p80 = scmp.eq.s32.totalorder %s22, 0
      %p81 = por %p79, %p80
      %p82 = scmp.ne.s32.totalorder %s68, %s69
      %p83 = scmp.eq.s32.totalorder %s23, 7
      %p84 = por %p82, %p83
      %p86 = scmp.ne.s32.totalorder %s69, %s85
      %p87 = scmp.eq.s32.totalorder %s23, 0
      %p88 = por %p86, %p87
      %s89 = ssub.s32 %s24, %s36
      %s90 = ssub.s32 %s25, %s32
      %s91 = sor.u32 %s89, %s90
      %p92 = scmp.eq.s32.totalorder %s91, 0
      %s94 = sadd.s32 %s93, 1
      %s95 = scalar_select %p92, %s93, %s94
      %p98 = pneg %p92
      %p99 = scmp.eq.s32.totalorder %s17, 7
      %p100 = por %p98, %p99
      %p101 = scmp.ne.s32.totalorder %s93, %s96
      %p102 = scmp.eq.s32.totalorder %s17, 0
      %p103 = por %p101, %p102
      %p104 = scmp.ne.s32.totalorder %s93, %s96
      %p105 = scmp.eq.s32.totalorder %s22, 7
      %p106 = por %p104, %p105
      %p107 = scmp.ne.s32.totalorder %s96, %s97
      %p108 = scmp.eq.s32.totalorder %s22, 0
      %p109 = por %p107, %p108
      %p110 = scmp.ne.s32.totalorder %s96, %s97
      %p111 = scmp.eq.s32.totalorder %s23, 7
      %p112 = por %p110, %p111
      %p114 = scmp.ne.s32.totalorder %s97, %s113
      %p115 = scmp.eq.s32.totalorder %s23, 0
      %p116 = por %p114, %p115
      %p117 = scmp.le.s32.totalorder 1, %s17
      %p118 = scmp.lt.s32.totalorder %s17, 9
      %p119 = pnand %p117, %p118
      %p120 = pneg %p119
      // Predicated region
      $region9: #{tpu_custom_call.1} parent=5 // pred_check
        _
      $region10: #{tpu_custom_call.1} parent=5 // pred_check_branch
        %122 = sbr.rel (%p119) target = $region12
      $region11: #{tpu_custom_call.1} parent=5 // pred_region
        %s123 = ssub.s32 %s17, 1
      $region12: #{tpu_custom_call.1} parent=5 // pred_fallthru
        _
      %p124 = scmp.lt.s32.totalorder %s17, 8
      // Predicated region
      $region13: #{tpu_custom_call.1} parent=5 // pred_check
        %p125 = pneg %p124
      $region14: #{tpu_custom_call.1} parent=5 // pred_check_branch
        %127 = sbr.rel (%p125) target = $region16
      $region15: #{tpu_custom_call.1} parent=5 // pred_region
        // Predicated region
        $region17: #{tpu_custom_call.1} parent=15 // pred_check
          %p128 = pneg %p49
        $region18: #{tpu_custom_call.1} parent=15 // pred_check_branch
          %130 = sbr.rel (%p128) target = $region20
        $region19: #{tpu_custom_call.1} parent=15 // pred_region
          %s131 = sand.u32 %s39, 1
          %s132 = scalar_lea.sflag [#allocation3], %s131
          %s133 = sand.u32 %s39, 1
          %s134 = smul.addr %s133, 64
          %s135 = scalar_lea.vmem [#allocation2], %s134
          %s136 = smul.u32 16, %s25
          %138 = vsyncadd %s132, 0
          %s139 = smul.addr %s136, 4
          %s140 = scalar_lea.hbm %s0, %s139
          %s141 = sshll.u32 %s140, 4
          %s142 = int_to_ptr.hbm [resolvable:$true] %s141
          %s143 = sshll.u32 %s135, 4
          %s144 = int_to_ptr.vmem [resolvable:$true] %s143
          %149 = dma.hbm_to_vmem [thread:$0]  %s142, 1024, %s144, %s132, 64, 64, 4
        $region20: #{tpu_custom_call.1} parent=15 // pred_fallthru
          _
        // Predicated region
        $region21: #{tpu_custom_call.1} parent=15 // pred_check
          %p150 = pneg %p75
        $region22: #{tpu_custom_call.1} parent=15 // pred_check_branch
          %152 = sbr.rel (%p150) target = $region24
        $region23: #{tpu_custom_call.1} parent=15 // pred_region
          %s153 = sand.u32 %s65, 1
          %s154 = scalar_lea.sflag [#allocation6], %s153
          %s155 = sand.u32 %s65, 1
          %s156 = smul.addr %s155, 64
          %s157 = scalar_lea.vmem [#allocation5], %s156
          %159 = vsyncadd %s154, 0
          %s160 = smul.addr %s24, 16
          %s161 = smul.addr %s160, 4
          %s162 = scalar_lea.hbm %s1, %s161
          %s163 = sshll.u32 %s162, 4
          %s164 = int_to_ptr.hbm [resolvable:$true] %s163
          %s165 = sshll.u32 %s157, 4
          %s166 = int_to_ptr.vmem [resolvable:$true] %s165
          %171 = dma.hbm_to_vmem [thread:$0]  %s164, 1024, %s166, %s154, 64, 64, 4
        $region24: #{tpu_custom_call.1} parent=15 // pred_fallthru
          _
      $region16: #{tpu_custom_call.1} parent=5 // pred_fallthru
        _
      %p172 = scmp.le.s32.totalorder 1, %s17
      %p173 = scmp.lt.s32.totalorder %s17, 9
      %p174 = pnand %p172, %p173
      %p175 = pneg %p174
      // Predicated region
      $region25: #{tpu_custom_call.1} parent=5 // pred_check
        _
      $region26: #{tpu_custom_call.1} parent=5 // pred_check_branch
        %177 = sbr.rel (%p174) target = $region28
      $region27: #{tpu_custom_call.1} parent=5 // pred_region
        %s178 = ssub.s32 %s17, 1
        %s179 = sand.u32 %s42, 1
        %s180 = scalar_lea.sflag [#allocation3], %s179
        %s181 = sand.u32 %s42, 1
        %s182 = smul.addr %s181, 64
        %s183 = scalar_lea.vmem [#allocation2], %s182
        // Predicated region
        $region29: #{tpu_custom_call.1} parent=27 // pred_check
          %p184 = pneg %p55
        $region30: #{tpu_custom_call.1} parent=27 // pred_check_branch
          %186 = sbr.rel (%p184) target = $region32
        $region31: #{tpu_custom_call.1} parent=27 // pred_region
          %188 = dma.done %s180, 1024
        $region32: #{tpu_custom_call.1} parent=27 // pred_fallthru
          _
        %s189 = sand.u32 %s68, 1
        %s190 = scalar_lea.sflag [#allocation6], %s189
        %s191 = sand.u32 %s68, 1
        %s192 = smul.addr %s191, 64
        %s193 = scalar_lea.vmem [#allocation5], %s192
        // Predicated region
        $region33: #{tpu_custom_call.1} parent=27 // pred_check
          %p194 = pneg %p81
        $region34: #{tpu_custom_call.1} parent=27 // pred_check_branch
          %196 = sbr.rel (%p194) target = $region36
        $region35: #{tpu_custom_call.1} parent=27 // pred_region
          %198 = dma.done %s190, 1024
        $region36: #{tpu_custom_call.1} parent=27 // pred_fallthru
          _
        %s199 = sand.u32 %s42, 1
        %s200 = scalar_lea.sflag [#allocation3], %s199
        %s201 = sand.u32 %s42, 1
        %s202 = smul.addr %s201, 64
        %s203 = scalar_lea.vmem [#allocation2], %s202
        %p204 = pneg %p55
        %p205 = pneg %p52
        %s206 = sand.u32 %s68, 1
        %s207 = scalar_lea.sflag [#allocation6], %s206
        %s208 = sand.u32 %s68, 1
        %s209 = smul.addr %s208, 64
        %s210 = scalar_lea.vmem [#allocation5], %s209
        %p211 = pneg %p81
        %p212 = pneg %p78
        %p213 = pneg %p109
        %p214 = pneg %p106
        %s215 = sand.u32 %s96, 1
        %s216 = scalar_lea.sflag [#allocation4], %s215
        %s217 = sand.u32 %s96, 1
        %s218 = smul.addr %s217, 64
        %s219 = scalar_lea.vmem [#allocation7], %s218
        %s220 = smul.u32 16, %s27
        %s221 = smul.u32 16, %s27
        %v222 = vld [vmem:[%s183] sm:$0xf]
        %v223 = vld [vmem:[%s183 + $0x4] sm:$0xf]
        %v224 = vld [vmem:[%s183 + $0x8] sm:$0xf]
        %v225 = vld [vmem:[%s183 + $0xc] sm:$0xf]
        %v226 = vld [vmem:[%s183 + $0x10] sm:$0xf]
        %v227 = vld [vmem:[%s183 + $0x14] sm:$0xf]
        %v228 = vld [vmem:[%s183 + $0x18] sm:$0xf]
        %v229 = vld [vmem:[%s183 + $0x1c] sm:$0xf]
        %v230 = vld [vmem:[%s183 + $0x20] sm:$0xf]
        %v231 = vld [vmem:[%s183 + $0x24] sm:$0xf]
        %v232 = vld [vmem:[%s183 + $0x28] sm:$0xf]
        %v233 = vld [vmem:[%s183 + $0x2c] sm:$0xf]
        %v234 = vld [vmem:[%s183 + $0x30] sm:$0xf]
        %v235 = vld [vmem:[%s183 + $0x34] sm:$0xf]
        %v236 = vld [vmem:[%s183 + $0x38] sm:$0xf]
        %v237 = vld [vmem:[%s183 + $0x3c] sm:$0xf]
        %v238 = vld [vmem:[%s193] sm:$0xf]
        %v239 = vld [vmem:[%s193 + $0x4] sm:$0xf]
        %v240 = vld [vmem:[%s193 + $0x8] sm:$0xf]
        %v241 = vld [vmem:[%s193 + $0xc] sm:$0xf]
        %v242 = vld [vmem:[%s193 + $0x10] sm:$0xf]
        %v243 = vld [vmem:[%s193 + $0x14] sm:$0xf]
        %v244 = vld [vmem:[%s193 + $0x18] sm:$0xf]
        %v245 = vld [vmem:[%s193 + $0x1c] sm:$0xf]
        %v246 = vld [vmem:[%s193 + $0x20] sm:$0xf]
        %v247 = vld [vmem:[%s193 + $0x24] sm:$0xf]
        %v248 = vld [vmem:[%s193 + $0x28] sm:$0xf]
        %v249 = vld [vmem:[%s193 + $0x2c] sm:$0xf]
        %v250 = vld [vmem:[%s193 + $0x30] sm:$0xf]
        %v251 = vld [vmem:[%s193 + $0x34] sm:$0xf]
        %v252 = vld [vmem:[%s193 + $0x38] sm:$0xf]
        %v253 = vld [vmem:[%s193 + $0x3c] sm:$0xf]
        %v270 = vunpack.c.l.b16 %v222
        %v271 = vunpack.c.l.b16 %v223
        %v272 = vunpack.c.l.b16 %v224
        %v273 = vunpack.c.l.b16 %v225
        %v274 = vunpack.c.l.b16 %v226
        %v275 = vunpack.c.l.b16 %v227
        %v276 = vunpack.c.l.b16 %v228
        %v277 = vunpack.c.l.b16 %v229
        %v278 = vunpack.c.l.b16 %v230
        %v279 = vunpack.c.l.b16 %v231
        %v280 = vunpack.c.l.b16 %v232
        %v281 = vunpack.c.l.b16 %v233
        %v282 = vunpack.c.l.b16 %v234
        %v283 = vunpack.c.l.b16 %v235
        %v284 = vunpack.c.l.b16 %v236
        %v285 = vunpack.c.l.b16 %v237
        %v286 = vpack.c.b16 %v271, %v270
        %v287 = vpack.c.b16 %v273, %v272
        %v288 = vpack.c.b16 %v275, %v274
        %v289 = vpack.c.b16 %v277, %v276
        %v290 = vpack.c.b16 %v279, %v278
        %v291 = vpack.c.b16 %v281, %v280
        %v292 = vpack.c.b16 %v283, %v282
        %v293 = vpack.c.b16 %v285, %v284
        %v318 = vunpack.c.l.b16 %v238
        %v319 = vunpack.c.l.b16 %v239
        %v320 = vunpack.c.l.b16 %v240
        %v321 = vunpack.c.l.b16 %v241
        %v322 = vunpack.c.l.b16 %v242
        %v323 = vunpack.c.l.b16 %v243
        %v324 = vunpack.c.l.b16 %v244
        %v325 = vunpack.c.l.b16 %v245
        %v326 = vunpack.c.l.b16 %v246
        %v327 = vunpack.c.l.b16 %v247
        %v328 = vunpack.c.l.b16 %v248
        %v329 = vunpack.c.l.b16 %v249
        %v330 = vunpack.c.l.b16 %v250
        %v331 = vunpack.c.l.b16 %v251
        %v332 = vunpack.c.l.b16 %v252
        %v333 = vunpack.c.l.b16 %v253
        %v334 = vpack.c.b16 %v319, %v318
        %v335 = vpack.c.b16 %v321, %v320
        %v336 = vpack.c.b16 %v323, %v322
        %v337 = vpack.c.b16 %v325, %v324
        %v338 = vpack.c.b16 %v327, %v326
        %v339 = vpack.c.b16 %v329, %v328
        %v340 = vpack.c.b16 %v331, %v330
        %v341 = vpack.c.b16 %v333, %v332
        %350 = vmatpush.bf16.msra.mxu0 %v341
        %351 = vmatpush.bf16.msra.mxu0 %v340
        %352 = vmatpush.bf16.msra.mxu0 %v339
        %353 = vmatpush.bf16.msra.mxu0 %v338
        %354 = vmatpush.bf16.msra.mxu0 %v337
        %355 = vmatpush.bf16.msra.mxu0 %v336
        %356 = vmatpush.bf16.msra.mxu0 %v335
        %357 = vmatpush.bf16.msra.mxu0 %v334
        %358 = vmatmul.bf16.gmra.mxu0 %v286
        %v359 = vpop.f32.mrf.mxu0
        %v360 = vadd.f32 0.0, %v359
        %v361 = vpop.f32.mrf.mxu0
        %v362 = vadd.f32 0.0, %v361
        %363 = vmatmul.bf16.gmra.mxu0 %v287
        %v364 = vpop.f32.mrf.mxu0
        %v365 = vadd.f32 0.0, %v364
        %v366 = vpop.f32.mrf.mxu0
        %v367 = vadd.f32 0.0, %v366
        %368 = vmatmul.bf16.gmra.mxu0 %v288
        %v369 = vpop.f32.mrf.mxu0
        %v370 = vadd.f32 0.0, %v369
        %v371 = vpop.f32.mrf.mxu0
        %v372 = vadd.f32 0.0, %v371
        %373 = vmatmul.bf16.gmra.mxu0 %v289
        %v374 = vpop.f32.mrf.mxu0
        %v375 = vadd.f32 0.0, %v374
        %v376 = vpop.f32.mrf.mxu0
        %v377 = vadd.f32 0.0, %v376
        %378 = vmatmul.bf16.gmra.mxu0 %v290
        %v379 = vpop.f32.mrf.mxu0
        %v380 = vadd.f32 0.0, %v379
        %v381 = vpop.f32.mrf.mxu0
        %v382 = vadd.f32 0.0, %v381
        %383 = vmatmul.bf16.gmra.mxu0 %v291
        %v384 = vpop.f32.mrf.mxu0
        %v385 = vadd.f32 0.0, %v384
        %v386 = vpop.f32.mrf.mxu0
        %v387 = vadd.f32 0.0, %v386
        %388 = vmatmul.bf16.gmra.mxu0 %v292
        %v389 = vpop.f32.mrf.mxu0
        %v390 = vadd.f32 0.0, %v389
        %v391 = vpop.f32.mrf.mxu0
        %v392 = vadd.f32 0.0, %v391
        %393 = vmatmul.bf16.gmra.mxu0 %v293
        %v394 = vpop.f32.mrf.mxu0
        %v395 = vadd.f32 0.0, %v394
        %v396 = vpop.f32.mrf.mxu0
        %v397 = vadd.f32 0.0, %v396
        %398 = vdwg.mxu0
        %v399 = vpack.c.bf16 %v360, %v360
        %v400 = vpack.c.bf16 %v362, %v362
        %v401 = vpack.c.bf16 %v365, %v365
        %v402 = vpack.c.bf16 %v367, %v367
        %v403 = vpack.c.bf16 %v370, %v370
        %v404 = vpack.c.bf16 %v372, %v372
        %v405 = vpack.c.bf16 %v375, %v375
        %v406 = vpack.c.bf16 %v377, %v377
        %v407 = vpack.c.bf16 %v380, %v380
        %v408 = vpack.c.bf16 %v382, %v382
        %v409 = vpack.c.bf16 %v385, %v385
        %v410 = vpack.c.bf16 %v387, %v387
        %v411 = vpack.c.bf16 %v390, %v390
        %v412 = vpack.c.bf16 %v392, %v392
        %v413 = vpack.c.bf16 %v395, %v395
        %v414 = vpack.c.bf16 %v397, %v397
        %415 = vst [vmem:[%s219] sm:$0xf] %v399
        %416 = vst [vmem:[%s219 + $0x4] sm:$0xf] %v400
        %417 = vst [vmem:[%s219 + $0x8] sm:$0xf] %v401
        %418 = vst [vmem:[%s219 + $0xc] sm:$0xf] %v402
        %419 = vst [vmem:[%s219 + $0x10] sm:$0xf] %v403
        %420 = vst [vmem:[%s219 + $0x14] sm:$0xf] %v404
        %421 = vst [vmem:[%s219 + $0x18] sm:$0xf] %v405
        %422 = vst [vmem:[%s219 + $0x1c] sm:$0xf] %v406
        %423 = vst [vmem:[%s219 + $0x20] sm:$0xf] %v407
        %424 = vst [vmem:[%s219 + $0x24] sm:$0xf] %v408
        %425 = vst [vmem:[%s219 + $0x28] sm:$0xf] %v409
        %426 = vst [vmem:[%s219 + $0x2c] sm:$0xf] %v410
        %427 = vst [vmem:[%s219 + $0x30] sm:$0xf] %v411
        %428 = vst [vmem:[%s219 + $0x34] sm:$0xf] %v412
        %429 = vst [vmem:[%s219 + $0x38] sm:$0xf] %v413
        %430 = vst [vmem:[%s219 + $0x3c] sm:$0xf] %v414
        %s431 = sand.u32 %s96, 1
        %s432 = scalar_lea.sflag [#allocation4], %s431
        %s433 = sand.u32 %s96, 1
        %s434 = smul.addr %s433, 64
        %s435 = scalar_lea.vmem [#allocation7], %s434
        // Predicated region
        $region37: #{tpu_custom_call.1} parent=27 // pred_check
          %p436 = pneg %p106
        $region38: #{tpu_custom_call.1} parent=27 // pred_check_branch
          %438 = sbr.rel (%p436) target = $region40
        $region39: #{tpu_custom_call.1} parent=27 // pred_region
          %s439 = smul.u32 16, %s27
          %441 = vsyncadd %s432, 0
          %s442 = smul.addr %s26, 32
          %s443 = sadd.s32 %s439, %s442
          %s444 = smul.addr %s443, 4
          %s445 = scalar_lea.hbm %s2, %s444
          %s446 = sshll.u32 %s435, 4
          %s447 = int_to_ptr.vmem [resolvable:$true] %s446
          %s448 = sshll.u32 %s445, 4
          %s449 = int_to_ptr.hbm [resolvable:$true] %s448
          %454 = dma.vmem_to_hbm [thread:$0]  %s447, 1024, %s449, %s432, 64, 64, 4
        $region40: #{tpu_custom_call.1} parent=27 // pred_fallthru
          _
      $region28: #{tpu_custom_call.1} parent=5 // pred_fallthru
        _
      %p455 = scmp.le.s32.totalorder 2, %s17
      // Predicated region
      $region41: #{tpu_custom_call.1} parent=5 // pred_check
        %p456 = pneg %p455
      $region42: #{tpu_custom_call.1} parent=5 // pred_check_branch
        %458 = sbr.rel (%p456) target = $region44
      $region43: #{tpu_custom_call.1} parent=5 // pred_region
        %s459 = ssub.s32 %s17, 2
        // Predicated region
        $region45: #{tpu_custom_call.1} parent=43 // pred_check
          %p460 = pneg %p112
        $region46: #{tpu_custom_call.1} parent=43 // pred_check_branch
          %462 = sbr.rel (%p460) target = $region48
        $region47: #{tpu_custom_call.1} parent=43 // pred_region
          %s463 = sand.u32 %s97, 1
          %s464 = scalar_lea.sflag [#allocation4], %s463
          %s465 = sand.u32 %s97, 1
          %s466 = smul.addr %s465, 64
          %s467 = scalar_lea.vmem [#allocation7], %s466
          %469 = dma.done %s464, 1024
        $region48: #{tpu_custom_call.1} parent=43 // pred_fallthru
          _
      $region44: #{tpu_custom_call.1} parent=5 // pred_fallthru
        _
    $region6: #{tpu_custom_call.1} parent=1 // loop_footer
      %s21 = sadd.s32 1, %s17
    $region7: #{tpu_custom_call.1} parent=1 // loop_footer_branch
      %16 = sbr.rel target = $region3
    $region8: #{tpu_custom_call.1} parent=1 // loop_exit
      _
    %470 = vsyncpa [#allocation3], 1
    %s471 = scalar_lea.sflag [#allocation3], 1
    %472 = vsyncpa %s471, 1
    %473 = vsyncpa [#allocation6], 1
    %s474 = scalar_lea.sflag [#allocation6], 1
    %475 = vsyncpa %s474, 1
    %476 = vsyncpa [#allocation4], 1
    %s477 = scalar_lea.sflag [#allocation4], 1
    %478 = vsyncpa %s477, 1

</llo_original>
